<compile_context>
chip_gen: v7x
topology: tpu7x:2x2x1
jax: 0.10.0
libtpu: 0.0.40
codegen_flags: <defaults>
</compile_context>

<pallas_src>
import math
import jax
import jax.numpy as jnp
from jax.experimental import pallas as pl
from jax.experimental.pallas import tpu as pltpu


def _round_up(x, m):
    return ((x + m - 1) // m) * m


def _largest_dividing_tile(padded, unit, cap):
    """Largest multiple of `unit` that divides `padded` and is <= cap."""
    best = unit
    t = unit
    limit = min(cap, padded)
    while t <= limit:
        if padded % t == 0:
            best = t
        t += unit
    return best


# ------------------------------------------------------------------ kernels --

def _linear_kernel_f32_out(x_ref, w_ref, b_ref, o_ref):
    """f32 output: accumulate directly into the resident output tile."""
    @pl.when(pl.program_id(2) == 0)
    def _():
        o_ref[...] = jnp.zeros_like(o_ref) + b_ref[...]          # init with bias
    o_ref[...] += jnp.dot(x_ref[...], w_ref[...],
                          preferred_element_type=jnp.float32)


def _linear_kernel_acc(x_ref, w_ref, b_ref, o_ref, acc_ref):
    """Narrow output dtypes: f32 scratch accumulator, cast at the last K step."""
    k = pl.program_id(2)

    @pl.when(k == 0)
    def _():
        acc_ref[...] = jnp.zeros_like(acc_ref)

    acc_ref[...] += jnp.dot(x_ref[...], w_ref[...],
                            preferred_element_type=jnp.float32)

    @pl.when(k == pl.num_programs(2) - 1)
    def _():
        o_ref[...] = (acc_ref[...] + b_ref[...]).astype(o_ref.dtype)


# ----------------------------------------------------------------- wrappers --

def prepare_linear_params(weight, bias=None, *, compute_dtype=None):
    """One-time prep of nn.Linear params for the Pallas kernel.

    weight (out_dim, in_dim) -> transposed + zero-padded (k_pad, n_pad);
    bias   (out_dim,)        -> f32 (1, n_pad).
    Do this ONCE at init (not per forward call) to avoid an extra HBM pass.
    """
    out_dim, in_dim = weight.shape
    k_pad = _round_up(in_dim, 128)
    n_pad = _round_up(out_dim, 128)
    w_t = jnp.pad(weight.T, ((0, k_pad - in_dim), (0, n_pad - out_dim)))
    if compute_dtype is not None:
        w_t = w_t.astype(compute_dtype)
    if bias is None:
        b = jnp.zeros((1, n_pad), jnp.float32)
    else:
        b = jnp.pad(bias.astype(jnp.float32), (0, n_pad - out_dim)).reshape(1, n_pad)
    return w_t, b, out_dim


def linear_norm_forward_prepared(x, w_t_pad, b_pad, out_dim, *,
                                 tm_cap=512, tn_cap=512, tk_cap=2048,
                                 vmem_limit_bytes=48 * 1024 * 1024):
    """y = x @ W^T + b using pre-transposed / pre-padded params."""
    k_pad, n_pad = w_t_pad.shape
    in_dim = x.shape[-1]
    lead = x.shape[:-1]
    m = int(math.prod(lead)) if lead else 1
    out_dtype = x.dtype

    # Kernel compute dtype follows the prepared weight (e.g. bf16 fast path).
    x2 = x.reshape(m, in_dim).astype(w_t_pad.dtype)

    in_dsize = jnp.dtype(x2.dtype).itemsize
    w_dsize = jnp.dtype(w_t_pad.dtype).itemsize
    out_dsize = jnp.dtype(out_dtype).itemsize

    # ---- tile selection ------------------------------------------------------
    m_unit = 8 * max(1, 4 // in_dsize)          # 8 for f32, 16 for bf16 packing
    m_pad = _round_up(m, m_unit)
    tm = min(tm_cap, m_pad)                     # multiple of m_unit
    m_pad = _round_up(m_pad, tm)
    tn = _largest_dividing_tile(n_pad, 128, tn_cap)

    # v7x megacore: expose >= 2 blocks on the parallel (M, N) axes if possible.
    if (m_pad // tm) * (n_pad // tn) == 1:
        if n_pad >= 256:
            tn = _largest_dividing_tile(n_pad, 128, n_pad // 2)
        elif m_pad >= 2 * m_unit:
            tm = _round_up(m_pad // 2, m_unit)
            m_pad = _round_up(m_pad, tm)

    # tk: largest 128-multiple dividing k_pad whose working set fits the budget.
    budget = int(0.6 * vmem_limit_bytes)
    tk = 128
    t = 128
    limit = min(tk_cap, k_pad)
    while t <= limit:
        if k_pad % t == 0:
            vmem = (2 * tm * t * in_dsize         # x tiles (double buffered)
                    + 2 * t * tn * w_dsize        # weight tiles
                    + 2 * tm * tn * out_dsize     # output tiles
                    + tm * tn * 4                 # f32 accumulator (worst case)
                    + 2 * tn * 4)                 # bias
            if vmem <= budget:
                tk = t
        t += 128

    grid = (m_pad // tm, n_pad // tn, k_pad // tk)

    # ---- pad activations (weight/bias were padded once at prepare time) -----
    x_p = jnp.pad(x2, ((0, m_pad - m), (0, k_pad - in_dim)))

    if jnp.dtype(out_dtype) == jnp.dtype(jnp.float32):
        kernel = _linear_kernel_f32_out
        scratch_shapes = []
    else:
        kernel = _linear_kernel_acc
        scratch_shapes = [pltpu.VMEM((tm, tn), jnp.float32)]

    # Advisory cost for XLA's scheduler; count actual traffic incl. re-reads.
    cost = pl.CostEstimate(
        flops=2 * m_pad * n_pad * k_pad,
        transcendentals=0,
        bytes_accessed=(m_pad * k_pad * in_dsize * grid[1]      # x re-read per N block
                        + k_pad * n_pad * w_dsize * grid[0]     # W re-read per M block
                        + n_pad * 4 * grid[0]                   # bias
                        + m_pad * n_pad * out_dsize),           # output writeback
    )

    out = pl.pallas_call(
        kernel,
        out_shape=jax.ShapeDtypeStruct((m_pad, n_pad), out_dtype),
        grid_spec=pltpu.PrefetchScalarGridSpec(
            num_scalar_prefetch=0,
            grid=grid,
            in_specs=[
                pl.BlockSpec((tm, tk), lambda i, j, k: (i, k)),   # x rows
                pl.BlockSpec((tk, tn), lambda i, j, k: (k, j)),   # W^T (pre-transposed)
                pl.BlockSpec((1, tn), lambda i, j, k: (0, j)),    # bias
            ],
            out_specs=pl.BlockSpec((tm, tn), lambda i, j, k: (i, j)),
            scratch_shapes=scratch_shapes,
        ),
        compiler_params=pltpu.CompilerParams(
            dimension_semantics=("parallel", "parallel", "arbitrary"),
            vmem_limit_bytes=vmem_limit_bytes,
        ),
        cost_estimate=cost,
    )(x_p, w_t_pad, b_pad)

    # Strip padding and restore leading dims.
    out = out[:m, :out_dim]
    return out.reshape(*lead, out_dim)


def linear_norm_forward(x, weight, bias=None, *, compute_dtype=None, **kwargs):
    """Convenience wrapper matching nn.Linear: y = x @ weight.T + bias.

    For production, call prepare_linear_params() once and reuse the result
    with linear_norm_forward_prepared() (avoids per-call weight pad/transpose).
    """
    w_t, b, out_dim = prepare_linear_params(weight, bias, compute_dtype=compute_dtype)
    return linear_norm_forward_prepared(x, w_t, b, out_dim, **kwargs)


def init_linear_norm_params(key, in_dim, out_dim, w_init_gain="linear",
                            dtype=jnp.float32):
    """Deterministic synthetic init matching LinearNorm.__init__ shapes.

    weight: xavier_uniform_ with gain=calculate_gain(w_init_gain) ('linear'->1.0)
    bias:   torch.nn.Linear default U(-1/sqrt(in_dim), 1/sqrt(in_dim))
    """
    gain = 1.0  # calculate_gain('linear') == 1.0
    k_w, k_b = jax.random.split(key)
    bound_w = gain * math.sqrt(6.0 / (in_dim + out_dim))
    weight = jax.random.uniform(k_w, (out_dim, in_dim), dtype,
                                minval=-bound_w, maxval=bound_w)
    bound_b = 1.0 / math.sqrt(in_dim)
    bias = jax.random.uniform(k_b, (out_dim,), dtype,
                              minval=-bound_b, maxval=bound_b)
    return weight, bias


if __name__ == "__main__":
    key = jax.random.PRNGKey(0)
    k_x, k_p = jax.random.split(key)

    batch, seq, in_dim, out_dim = 2, 8, 32, 64
    x = jax.random.normal(k_x, (batch, seq, in_dim), jnp.float32)
    weight, bias = init_linear_norm_params(k_p, in_dim, out_dim, "linear")

    y_ref = x @ weight.T + bias

    # Exact f32 path: prepare params once, reuse across calls.
    w_t, b_p, n_out = prepare_linear_params(weight, bias)
    y = jax.block_until_ready(linear_norm_forward_prepared(x, w_t, b_p, n_out))
    assert y.shape == (batch, seq, out_dim)
    assert jnp.allclose(y, y_ref, atol=1e-5, rtol=1e-5)

    # Optional bf16 MXU fast path (f32 accumulation, f32 output).
    w16, b16, _ = prepare_linear_params(weight, bias, compute_dtype=jnp.bfloat16)
    y16 = jax.block_until_ready(linear_norm_forward_prepared(x, w16, b16, n_out))
    assert y16.shape == (batch, seq, out_dim)
    assert jnp.allclose(y16, y_ref, atol=5e-2, rtol=5e-2)

    # bf16 in / bf16 out exercises the scratch-accumulator kernel variant.
    yb = jax.block_until_ready(
        linear_norm_forward(x.astype(jnp.bfloat16), weight, bias,
                            compute_dtype=jnp.bfloat16))
    assert yb.dtype == jnp.bfloat16 and yb.shape == (batch, seq, out_dim)
    assert jnp.allclose(yb.astype(jnp.float32), y_ref, atol=1e-1, rtol=1e-1)

    print("KERNEL_OK")
</pallas_src>

<mosaic_0001>
module attributes {stable_mosaic.version = 11 : i64} {
  func.func @_linear_kernel_f32_out(%arg0: i32, %arg1: i32, %arg2: i32, %arg3: memref<8x128xf32, #tpu.memory_space<vmem>>, %arg4: memref<128x128xf32, #tpu.memory_space<vmem>>, %arg5: memref<1x128xf32, #tpu.memory_space<vmem>>, %arg6: memref<8x128xf32, #tpu.memory_space<vmem>>) attributes {dimension_semantics = [#tpu.dimension_semantics<parallel>, #tpu.dimension_semantics<parallel>, #tpu.dimension_semantics<arbitrary>], iteration_bounds = array<i64: 2, 1, 1>, scalar_prefetch = 0 : i64, scratch_operands = 0 : i64, tpu.core_type = #tpu.core_type<tc>, window_params = [{transform_indices = @transform_0, window_bounds = array<i64: 8, 128>}, {transform_indices = @transform_1, window_bounds = array<i64: 128, 128>}, {transform_indices = @transform_2, window_bounds = array<i64: 1, 128>}, {transform_indices = @transform_3, window_bounds = array<i64: 8, 128>}]} {
    %c0_i32 = arith.constant 0 : i32
    %0 = arith.cmpi eq, %arg2, %c0_i32 : i32
    %1 = arith.extui %0 : i1 to i32
    %c0_i32_0 = arith.constant 0 : i32
    %2 = arith.cmpi ne, %1, %c0_i32_0 : i32
    scf.if %2 {
      %cst_8 = arith.constant 0.000000e+00 : f32
      %9 = vector.broadcast %cst_8 : f32 to vector<8x128xf32>
      %c0_9 = arith.constant 0 : index
      %c0_10 = arith.constant 0 : index
      %10 = vector.load %arg5[%c0_9, %c0_10] : memref<1x128xf32, #tpu.memory_space<vmem>>, vector<1x128xf32>
      %11 = vector.broadcast %10 : vector<1x128xf32> to vector<8x128xf32>
      %12 = arith.addf %9, %11 : vector<8x128xf32>
      %c0_11 = arith.constant 0 : index
      %c0_12 = arith.constant 0 : index
      %13 = vector.load %arg6[%c0_11, %c0_12] : memref<8x128xf32, #tpu.memory_space<vmem>>, vector<8x128xf32>
      tpu.vector_store %arg6[%c0_11, %c0_12], %12 {strides = array<i32>} : memref<8x128xf32, #tpu.memory_space<vmem>>, vector<8x128xf32>,
    } else {
    }
    %c0 = arith.constant 0 : index
    %c0_1 = arith.constant 0 : index
    %3 = vector.load %arg6[%c0, %c0_1] : memref<8x128xf32, #tpu.memory_space<vmem>>, vector<8x128xf32>
    %c0_2 = arith.constant 0 : index
    %c0_3 = arith.constant 0 : index
    %4 = vector.load %arg3[%c0_2, %c0_3] : memref<8x128xf32, #tpu.memory_space<vmem>>, vector<8x128xf32>
    %c0_4 = arith.constant 0 : index
    %c0_5 = arith.constant 0 : index
    %5 = vector.load %arg4[%c0_4, %c0_5] : memref<128x128xf32, #tpu.memory_space<vmem>>, vector<128x128xf32>
    %cst = arith.constant dense<0.000000e+00> : vector<8x128xf32>
    %6 = tpu.matmul %4, %5, %cst {dimension_numbers = #tpu.dot_dimension_numbers<[1], [0], [0], [1], [0, 0, 1, 1], [], []>} : vector<8x128xf32>, vector<128x128xf32>, vector<8x128xf32> -> vector<8x128xf32>
    %7 = arith.addf %3, %6 : vector<8x128xf32>
    %c0_6 = arith.constant 0 : index
    %c0_7 = arith.constant 0 : index
    %8 = vector.load %arg6[%c0_6, %c0_7] : memref<8x128xf32, #tpu.memory_space<vmem>>, vector<8x128xf32>
    tpu.vector_store %arg6[%c0_6, %c0_7], %7 {strides = array<i32>} : memref<8x128xf32, #tpu.memory_space<vmem>>, vector<8x128xf32>,
    return
  }
  func.func @transform_0(%arg0: i32, %arg1: i32, %arg2: i32) -> (i32, i32) {
    %c0_i32 = arith.constant 0 : i32
    return %arg0, %arg2 : i32, i32
  }
  func.func @transform_1(%arg0: i32, %arg1: i32, %arg2: i32) -> (i32, i32) {
    %c0_i32 = arith.constant 0 : i32
    return %arg2, %arg1 : i32, i32
  }
  func.func @transform_2(%arg0: i32, %arg1: i32, %arg2: i32) -> (i32, i32) {
    %c0_i32 = arith.constant 0 : i32
    %c0_i32_0 = arith.constant 0 : i32
    return %c0_i32, %arg1 : i32, i32
  }
  func.func @transform_3(%arg0: i32, %arg1: i32, %arg2: i32) -> (i32, i32) {
    %c0_i32 = arith.constant 0 : i32
    return %arg0, %arg1 : i32, i32
  }
}

</mosaic_0001>

<llo_original>
// kernel: tpu_custom_call.1
$region0: #{tpu_custom_call.1}
  #allocation0 [shape = 'u32[]', space=smem, size = 0x4, offset = 0x4, fixed_abs, tag = 'smem constant byte address 0x4 - core index']
  #allocation1 [shape = 'u32[144,128]{1,0:T(1,128)}', space=vmem, size = 0x12000, scoped, tag = 'internal scratch']
  %s0 = inlined_call_operand.hbm [shape: f32[16,128], index: 0, kind: input, shape index: {}]
  %s1 = inlined_call_operand.hbm [shape: f32[128,128], index: 1, kind: input, shape index: {}]
  %s2 = inlined_call_operand.vmem [shape: f32[1,128], index: 2, kind: input, shape index: {}]
  %s3 = inlined_call_operand.hbm [shape: f32[16,128], index: 3, kind: output, shape index: {}]
  %s4 = sld [smem:[#allocation0]]
  $region57: #{tpu_custom_call.1} parent=0
    _
  %s6 = ssub.s32 1, %s4
  %s7 = scalar_select 0, %s6, %s4
  $region1: #{tpu_custom_call.1} parent=0
    #allocation2 [shape = 'u8[8192]{0}', space=vmem, size = 0x2000, scoped, tag = 'input window, operand 0']
    #allocation3 [shape = 's32[2]{0}', space=sflag, size = 0x8, scoped, tag = 'scoped memory for tpu_custom_call.1']
    #allocation4 [shape = 's32[2]{0}', space=sflag, size = 0x8, scoped, tag = 'scoped memory for tpu_custom_call.1']
    #allocation5 [shape = 'u8[65536]{0}', space=vmem, size = 0x10000, scoped, tag = 'input window, operand 1, single buffered']
    #allocation6 [shape = 's32[1]{0}', space=sflag, size = 0x4, scoped, tag = 'scoped memory for tpu_custom_call.1']
    #allocation7 [shape = 'u8[8192]{0}', space=vmem, size = 0x2000, scoped, tag = 'output window, operand 0']
    %8 = vsyncpa [#allocation3], 0
    %s9 = scalar_lea.sflag [#allocation3], 1
    %10 = vsyncpa %s9, 0
    %11 = vsyncpa [#allocation6], 0
    %12 = vsyncpa [#allocation4], 0
    %s13 = scalar_lea.sflag [#allocation4], 1
    %14 = vsyncpa %s13, 0
    loop: start=0, step=1, limit=4
    $region2: #{tpu_custom_call.1} parent=1 // loop_pre_header
      _
    $region3: #{tpu_custom_call.1} parent=1 // loop_header
      %s16 = sphi 0, %s20
      %p17 = scmp.ge.s32.totalorder %s16, 4
      %s23 = sphi 0, %s42
      %s24 = sphi 0, %s38
      %s25 = sphi 0, %s34
      %s26 = sphi 0, %s23
      %s27 = sphi 0, %s24
      %s28 = sphi 0, %s25
      %s29 = sphi 0, %s26
      %s30 = sphi 0, %s27
      %s31 = sphi 0, %s28
      %s47 = sphi 0, %s49
      %s50 = sphi 0, %s47
      %s51 = sphi 0, %s50
      %s67 = sphi 0, %s51
      %s75 = sphi 0, %s77
      %s78 = sphi 0, %s75
      %s79 = sphi 0, %s78
      %s95 = sphi 0, %s79
      %s101 = sphi 0, %s103
      %s104 = sphi 0, %s101
      %s105 = sphi 0, %s104
      %s121 = sphi 0, %s105
      %s129 = sphi 0, %s131
      %s132 = sphi 0, %s129
      %s133 = sphi 0, %s132
      %s149 = sphi 0, %s133
    $region4: #{tpu_custom_call.1} parent=1 // loop_header_branch
      %19 = sbr.rel (%p17) target = $region8
    $region5: #{tpu_custom_call.1} parent=1 // loop_body
      %s21 = ssub.s32 %s16, 1
      %s22 = ssub.s32 %s16, 2
      %s32 = sadd.s32 1, %s25
      %p33 = scmp.ge.s32.totalorder %s32, 1
      %s34 = scalar_select %p33, 0, %s32
      %s35 = sadd.s32 1, %s24
      %s36 = scalar_select %p33, %s35, %s24
      %p37 = scmp.ge.s32.totalorder %s36, 1
      %s38 = scalar_select %p37, 0, %s36
      %s39 = sadd.s32 1, %s23
      %s40 = scalar_select %p37, %s39, %s23
      %p41 = scmp.ge.s32.totalorder %s40, 2
      %s42 = scalar_select %p41, 0, %s40
      %s43 = ssub.s32 %s23, %s42
      %s44 = ssub.s32 %s25, %s34
      %s45 = sor.u32 %s43, %s44
      %p46 = scmp.eq.s32.totalorder %s45, 0
      %s48 = sadd.s32 %s47, 1
      %s49 = scalar_select %p46, %s47, %s48
      %p52 = pneg %p46
      %p53 = scmp.eq.s32.totalorder %s16, 1
      %p54 = por %p52, %p53
      %p55 = scmp.ne.s32.totalorder %s47, %s50
      %p56 = scmp.eq.s32.totalorder %s16, 0
      %p57 = por %p55, %p56
      %p58 = scmp.ne.s32.totalorder %s47, %s50
      %p59 = scmp.eq.s32.totalorder %s21, 1
      %p60 = por %p58, %p59
      %p61 = scmp.ne.s32.totalorder %s50, %s51
      %p62 = scmp.eq.s32.totalorder %s21, 0
      %p63 = por %p61, %p62
      %p64 = scmp.ne.s32.totalorder %s50, %s51
      %p65 = scmp.eq.s32.totalorder %s22, 1
      %p66 = por %p64, %p65
      %p68 = scmp.ne.s32.totalorder %s51, %s67
      %p69 = scmp.eq.s32.totalorder %s22, 0
      %p70 = por %p68, %p69
      %s71 = ssub.s32 %s25, %s34
      %s72 = ssub.s32 %s24, %s38
      %s73 = sor.u32 %s71, %s72
      %p74 = scmp.eq.s32.totalorder %s73, 0
      %s76 = sadd.s32 %s75, 1
      %s77 = scalar_select %p74, %s75, %s76
      %p80 = pneg %p74
      %p81 = scmp.eq.s32.totalorder %s16, 1
      %p82 = por %p80, %p81
      %p83 = scmp.ne.s32.totalorder %s75, %s78
      %p84 = scmp.eq.s32.totalorder %s16, 0
      %p85 = por %p83, %p84
      %p86 = scmp.ne.s32.totalorder %s75, %s78
      %p87 = scmp.eq.s32.totalorder %s21, 1
      %p88 = por %p86, %p87
      %p89 = scmp.ne.s32.totalorder %s78, %s79
      %p90 = scmp.eq.s32.totalorder %s21, 0
      %p91 = por %p89, %p90
      %p92 = scmp.ne.s32.totalorder %s78, %s79
      %p93 = scmp.eq.s32.totalorder %s22, 1
      %p94 = por %p92, %p93
      %p96 = scmp.ne.s32.totalorder %s79, %s95
      %p97 = scmp.eq.s32.totalorder %s22, 0
      %p98 = por %p96, %p97
      %s99 = ssub.s32 %s24, %s38
      %p100 = scmp.eq.s32.totalorder %s99, 0
      %s102 = sadd.s32 %s101, 1
      %s103 = scalar_select %p100, %s101, %s102
      %p106 = pneg %p100
      %p107 = scmp.eq.s32.totalorder %s16, 1
      %p108 = por %p106, %p107
      %p109 = scmp.ne.s32.totalorder %s101, %s104
      %p110 = scmp.eq.s32.totalorder %s16, 0
      %p111 = por %p109, %p110
      %p112 = scmp.ne.s32.totalorder %s101, %s104
      %p113 = scmp.eq.s32.totalorder %s21, 1
      %p114 = por %p112, %p113
      %p115 = scmp.ne.s32.totalorder %s104, %s105
      %p116 = scmp.eq.s32.totalorder %s21, 0
      %p117 = por %p115, %p116
      %p118 = scmp.ne.s32.totalorder %s104, %s105
      %p119 = scmp.eq.s32.totalorder %s22, 1
      %p120 = por %p118, %p119
      %p122 = scmp.ne.s32.totalorder %s105, %s121
      %p123 = scmp.eq.s32.totalorder %s22, 0
      %p124 = por %p122, %p123
      %s125 = ssub.s32 %s23, %s42
      %s126 = ssub.s32 %s24, %s38
      %s127 = sor.u32 %s125, %s126
      %p128 = scmp.eq.s32.totalorder %s127, 0
      %s130 = sadd.s32 %s129, 1
      %s131 = scalar_select %p128, %s129, %s130
      %p134 = pneg %p128
      %p135 = scmp.eq.s32.totalorder %s16, 1
      %p136 = por %p134, %p135
      %p137 = scmp.ne.s32.totalorder %s129, %s132
      %p138 = scmp.eq.s32.totalorder %s16, 0
      %p139 = por %p137, %p138
      %p140 = scmp.ne.s32.totalorder %s129, %s132
      %p141 = scmp.eq.s32.totalorder %s21, 1
      %p142 = por %p140, %p141
      %p143 = scmp.ne.s32.totalorder %s132, %s133
      %p144 = scmp.eq.s32.totalorder %s21, 0
      %p145 = por %p143, %p144
      %p146 = scmp.ne.s32.totalorder %s132, %s133
      %p147 = scmp.eq.s32.totalorder %s22, 1
      %p148 = por %p146, %p147
      %p150 = scmp.ne.s32.totalorder %s133, %s149
      %p151 = scmp.eq.s32.totalorder %s22, 0
      %p152 = por %p150, %p151
      %p153 = scmp.le.s32.totalorder 1, %s16
      %p154 = scmp.lt.s32.totalorder %s16, 3
      %p155 = pnand %p153, %p154
      %p156 = pneg %p155
      // Predicated region
      $region9: #{tpu_custom_call.1} parent=5 // pred_check
        _
      $region10: #{tpu_custom_call.1} parent=5 // pred_check_branch
        %158 = sbr.rel (%p155) target = $region12
      $region11: #{tpu_custom_call.1} parent=5 // pred_region
        %s159 = ssub.s32 %s16, 1
        // Predicated region
        $region13: #{tpu_custom_call.1} parent=11 // pred_check
          %p160 = pneg %p91
        $region14: #{tpu_custom_call.1} parent=11 // pred_check_branch
          %162 = sbr.rel (%p160) target = $region16
        $region15: #{tpu_custom_call.1} parent=11 // pred_region
          %s163 = smul.u32 16, %s28
          %s165 = ssub.s32 2048, 2048
          %166 = vsyncadd [#allocation6], %s165
          %s167 = sadd.s32 %s27, %s163
          %s168 = smul.addr %s167, 128
          %s169 = scalar_lea.hbm %s1, %s168
          %s170 = sshll.u32 [#allocation5], 4
          %s171 = int_to_ptr.vmem [resolvable:$true] %s170
          %176 = dma.hbm_to_vmem [thread:$0]  %s169, 2048, %s171, [#allocation6], 128, 128, 8
        $region16: #{tpu_custom_call.1} parent=11 // pred_fallthru
          _
        // Predicated region
        $region17: #{tpu_custom_call.1} parent=11 // pred_check
          %p177 = pneg %p117
        $region18: #{tpu_custom_call.1} parent=11 // pred_check_branch
          %179 = sbr.rel (%p177) target = $region20
        $region19: #{tpu_custom_call.1} parent=11 // pred_region
          %p180 = scmp.lt.s32.totalorder %s27, 0
          %s181 = scalar_select %p180, %s27, 0
          %s182 = scalar_lea.vmem %s2, %s181
        $region20: #{tpu_custom_call.1} parent=11 // pred_fallthru
          _
      $region12: #{tpu_custom_call.1} parent=5 // pred_fallthru
        _
      %p183 = scmp.lt.s32.totalorder %s16, 2
      // Predicated region
      $region21: #{tpu_custom_call.1} parent=5 // pred_check
        %p184 = pneg %p183
      $region22: #{tpu_custom_call.1} parent=5 // pred_check_branch
        %186 = sbr.rel (%p184) target = $region24
      $region23: #{tpu_custom_call.1} parent=5 // pred_region
        // Predicated region
        $region25: #{tpu_custom_call.1} parent=23 // pred_check
          %p187 = pneg %p57
        $region26: #{tpu_custom_call.1} parent=23 // pred_check_branch
          %189 = sbr.rel (%p187) target = $region28
        $region27: #{tpu_custom_call.1} parent=23 // pred_region
          %s190 = sand.u32 %s47, 1
          %s191 = scalar_lea.sflag [#allocation3], %s190
          %s192 = sand.u32 %s47, 1
          %s193 = smul.addr %s192, 8
          %s194 = scalar_lea.vmem [#allocation2], %s193
          %s196 = ssub.s32 128, 128
          %197 = vsyncadd %s191, %s196
          %s198 = sadd.s32 %s25, %s23
          %s199 = smul.addr %s198, 128
          %s200 = scalar_lea.hbm %s0, %s199
          %s202 = sshll.u32 %s194, 4
          %s203 = int_to_ptr.vmem [resolvable:$true] %s202
          %205 = dma.hbm_to_vmem [thread:$0]  %s200, 128, %s203, %s191
        $region28: #{tpu_custom_call.1} parent=23 // pred_fallthru
          _
      $region24: #{tpu_custom_call.1} parent=5 // pred_fallthru
        _
      %p206 = scmp.le.s32.totalorder 1, %s16
      %p207 = scmp.lt.s32.totalorder %s16, 3
      %p208 = pnand %p206, %p207
      %p209 = pneg %p208
      // Predicated region
      $region29: #{tpu_custom_call.1} parent=5 // pred_check
        _
      $region30: #{tpu_custom_call.1} parent=5 // pred_check_branch
        %211 = sbr.rel (%p208) target = $region32
      $region31: #{tpu_custom_call.1} parent=5 // pred_region
        %s212 = ssub.s32 %s16, 1
        %s213 = sand.u32 %s50, 1
        %s214 = scalar_lea.sflag [#allocation3], %s213
        %s215 = sand.u32 %s50, 1
        %s216 = smul.addr %s215, 8
        %s217 = scalar_lea.vmem [#allocation2], %s216
        // Predicated region
        $region33: #{tpu_custom_call.1} parent=31 // pred_check
          %p218 = pneg %p63
        $region34: #{tpu_custom_call.1} parent=31 // pred_check_branch
          %220 = sbr.rel (%p218) target = $region36
        $region35: #{tpu_custom_call.1} parent=31 // pred_region
          %221 = dma.done %s214, 128
        $region36: #{tpu_custom_call.1} parent=31 // pred_fallthru
          _
        // Predicated region
        $region37: #{tpu_custom_call.1} parent=31 // pred_check
          %p222 = pneg %p91
        $region38: #{tpu_custom_call.1} parent=31 // pred_check_branch
          %224 = sbr.rel (%p222) target = $region40
        $region39: #{tpu_custom_call.1} parent=31 // pred_region
          %225 = dma.done [#allocation6], 2048
        $region40: #{tpu_custom_call.1} parent=31 // pred_fallthru
          _
        %s226 = sand.u32 %s50, 1
        %s227 = scalar_lea.sflag [#allocation3], %s226
        %s228 = sand.u32 %s50, 1
        %s229 = smul.addr %s228, 8
        %s230 = scalar_lea.vmem [#allocation2], %s229
        %p231 = pneg %p63
        %p232 = pneg %p60
        %p233 = pneg %p91
        %p234 = pneg %p88
        %p235 = scmp.lt.s32.totalorder %s27, 0
        %s236 = scalar_select %p235, %s27, 0
        %s237 = scalar_lea.vmem %s2, %s236
        %p238 = pneg %p117
        %p239 = pneg %p114
        %p240 = pneg %p145
        %p241 = pneg %p142
        %s242 = sand.u32 %s132, 1
        %s243 = scalar_lea.sflag [#allocation4], %s242
        %s244 = sand.u32 %s132, 1
        %s245 = smul.addr %s244, 8
        %s246 = scalar_lea.vmem [#allocation7], %s245
        %s247 = smul.u32 16, %s28
        %p248 = scmp.lt.s32.totalorder %s27, 0
        %s249 = scalar_select %p248, %s27, 0
        %s250 = scalar_lea.vmem %s2, %s249
        %p251 = scmp.eq.s32.totalorder %s28, 0
        // Predicated region
        $region41: #{tpu_custom_call.1} parent=31 // pred_check
          %p252 = pneg %p251
        $region42: #{tpu_custom_call.1} parent=31 // pred_check_branch
          %254 = sbr.rel (%p252) target = $region44
        $region43: #{tpu_custom_call.1} parent=31 // pred_region
          %v255 = vld [vmem:[%s250] sm:$0x1]
          %v257 = vlaneseq
          %v258 = vshrl.u32 %v257, 7
          %v259 = vsub.s32 0, %v258
          %v260 = vrot.slane %v255, %v259
          %v262 = vadd.f32 %v260, 0.0
          %263 = vst [vmem:[%s246] sm:$0xff] %v262
        $region44: #{tpu_custom_call.1} parent=31 // pred_fallthru
          _
        %v264 = vld [vmem:[%s246] sm:$0xff]
        %v265 = vld [vmem:[%s217] sm:$0xff]
        %v266 = vld [vmem:[#allocation5] sm:$0xff]
        %v267 = vld [vmem:[#allocation5 + $0x8] sm:$0xff]
        %v268 = vld [vmem:[#allocation5 + $0x10] sm:$0xff]
        %v269 = vld [vmem:[#allocation5 + $0x18] sm:$0xff]
        %v270 = vld [vmem:[#allocation5 + $0x20] sm:$0xff]
        %v271 = vld [vmem:[#allocation5 + $0x28] sm:$0xff]
        %v272 = vld [vmem:[#allocation5 + $0x30] sm:$0xff]
        %v273 = vld [vmem:[#allocation5 + $0x38] sm:$0xff]
        %v274 = vld [vmem:[#allocation5 + $0x40] sm:$0xff]
        %v275 = vld [vmem:[#allocation5 + $0x48] sm:$0xff]
        %v276 = vld [vmem:[#allocation5 + $0x50] sm:$0xff]
        %v277 = vld [vmem:[#allocation5 + $0x58] sm:$0xff]
        %v278 = vld [vmem:[#allocation5 + $0x60] sm:$0xff]
        %v279 = vld [vmem:[#allocation5 + $0x68] sm:$0xff]
        %v280 = vld [vmem:[#allocation5 + $0x70] sm:$0xff]
        %v281 = vld [vmem:[#allocation5 + $0x78] sm:$0xff]
        %282 = vmatprep.subr.mxu0 0.0
        %283 = vmatpush1.msra.mxu0 %v266
        %284 = vmatprep.subr.mxu0 0.0
        %285 = vmatpush1.msra.mxu0 %v267
        %286 = vmatprep.subr.mxu0 0.0
        %287 = vmatpush1.msra.mxu0 %v268
        %288 = vmatprep.subr.mxu0 0.0
        %289 = vmatpush1.msra.mxu0 %v269
        %290 = vmatprep.subr.mxu0 0.0
        %291 = vmatpush1.msra.mxu0 %v270
        %292 = vmatprep.subr.mxu0 0.0
        %293 = vmatpush1.msra.mxu0 %v271
        %294 = vmatprep.subr.mxu0 0.0
        %295 = vmatpush1.msra.mxu0 %v272
        %296 = vmatprep.subr.mxu0 0.0
        %297 = vmatpush1.msra.mxu0 %v273
        %298 = vmatprep.subr.mxu0 0.0
        %299 = vmatpush1.msra.mxu0 %v274
        %300 = vmatprep.subr.mxu0 0.0
        %301 = vmatpush1.msra.mxu0 %v275
        %302 = vmatprep.subr.mxu0 0.0
        %303 = vmatpush1.msra.mxu0 %v276
        %304 = vmatprep.subr.mxu0 0.0
        %305 = vmatpush1.msra.mxu0 %v277
        %306 = vmatprep.subr.mxu0 0.0
        %307 = vmatpush1.msra.mxu0 %v278
        %308 = vmatprep.subr.mxu0 0.0
        %309 = vmatpush1.msra.mxu0 %v279
        %310 = vmatprep.subr.mxu0 0.0
        %311 = vmatpush1.msra.mxu0 %v280
        %312 = vmatprep.subr.mxu0 0.0
        %313 = vmatpush1.msra.mxu0 %v281
        %314 = vmatprep.subr.mxu0 0.0
        %315 = vmatpush1.msra.mxu0 0.0
        %316 = vmatprep.subr.mxu0 0.0
        %317 = vmatpush1.msra.mxu0 0.0
        %318 = vmatprep.subr.mxu0 0.0
        %319 = vmatpush1.msra.mxu0 0.0
        %320 = vmatprep.subr.mxu0 0.0
        %321 = vmatpush1.msra.mxu0 0.0
        %322 = vmatprep.subr.mxu0 0.0
        %323 = vmatpush1.msra.mxu0 0.0
        %324 = vmatprep.subr.mxu0 0.0
        %325 = vmatpush1.msra.mxu0 0.0
        %326 = vmatprep.subr.mxu0 0.0
        %327 = vmatpush1.msra.mxu0 0.0
        %328 = vmatprep.subr.mxu0 0.0
        %329 = vmatpush1.msra.mxu0 0.0
        %330 = vmatprep.subr.mxu0 0.0
        %331 = vmatpush1.msra.mxu0 0.0
        %332 = vmatprep.subr.mxu0 0.0
        %333 = vmatpush1.msra.mxu0 0.0
        %334 = vmatprep.subr.mxu0 0.0
        %335 = vmatpush1.msra.mxu0 0.0
        %336 = vmatprep.subr.mxu0 0.0
        %337 = vmatpush1.msra.mxu0 0.0
        %338 = vmatprep.subr.mxu0 0.0
        %339 = vmatpush1.msra.mxu0 0.0
        %340 = vmatprep.subr.mxu0 0.0
        %341 = vmatpush1.msra.mxu0 0.0
        %342 = vmatprep.subr.mxu0 0.0
        %343 = vmatpush1.msra.mxu0 0.0
        %344 = vmatprep.subr.mxu0 0.0
        %345 = vmatpush1.msra.mxu0 0.0
        %346 = vmatprep.mubr.f32.mxu0 0.0
        %347 = vmatmul.mubr.f32.gmra.mrb[0].mxu0 %v265
        %v348 = vpop.f32.mrb[0].mxu0
        %v349 = vadd.f32 0.0, %v348
        %v350 = vpop.f32.mrb[0].mxu0
        %351 = vdwg.mxu0
        %v352 = vadd.f32 %v264, %v349
        %353 = vst [vmem:[%s246] sm:$0xff] %v352
        %s354 = sand.u32 %s132, 1
        %s355 = scalar_lea.sflag [#allocation4], %s354
        %s356 = sand.u32 %s132, 1
        %s357 = smul.addr %s356, 8
        %s358 = scalar_lea.vmem [#allocation7], %s357
        // Predicated region
        $region45: #{tpu_custom_call.1} parent=31 // pred_check
          %p359 = pneg %p142
        $region46: #{tpu_custom_call.1} parent=31 // pred_check_branch
          %361 = sbr.rel (%p359) target = $region48
        $region47: #{tpu_custom_call.1} parent=31 // pred_region
          %s363 = ssub.s32 128, 128
          %364 = vsyncadd %s355, %s363
          %s365 = sadd.s32 %s27, %s26
          %s366 = smul.addr %s365, 128
          %s367 = scalar_lea.hbm %s3, %s366
          %s369 = sshll.u32 %s358, 4
          %s370 = int_to_ptr.vmem [resolvable:$true] %s369
          %372 = dma.vmem_to_hbm [thread:$0]  %s370, 128, %s367, %s355
        $region48: #{tpu_custom_call.1} parent=31 // pred_fallthru
          _
      $region32: #{tpu_custom_call.1} parent=5 // pred_fallthru
        _
      %p373 = scmp.le.s32.totalorder 2, %s16
      // Predicated region
      $region49: #{tpu_custom_call.1} parent=5 // pred_check
        %p374 = pneg %p373
      $region50: #{tpu_custom_call.1} parent=5 // pred_check_branch
        %376 = sbr.rel (%p374) target = $region52
      $region51: #{tpu_custom_call.1} parent=5 // pred_region
        %s377 = ssub.s32 %s16, 2
        // Predicated region
        $region53: #{tpu_custom_call.1} parent=51 // pred_check
          %p378 = pneg %p148
        $region54: #{tpu_custom_call.1} parent=51 // pred_check_branch
          %380 = sbr.rel (%p378) target = $region56
        $region55: #{tpu_custom_call.1} parent=51 // pred_region
          %s381 = sand.u32 %s133, 1
          %s382 = scalar_lea.sflag [#allocation4], %s381
          %s383 = sand.u32 %s133, 1
          %s384 = smul.addr %s383, 8
          %s385 = scalar_lea.vmem [#allocation7], %s384
          %386 = dma.done %s382, 128
        $region56: #{tpu_custom_call.1} parent=51 // pred_fallthru
          _
      $region52: #{tpu_custom_call.1} parent=5 // pred_fallthru
        _
    $region6: #{tpu_custom_call.1} parent=1 // loop_footer
      %s20 = sadd.s32 1, %s16
    $region7: #{tpu_custom_call.1} parent=1 // loop_footer_branch
      %15 = sbr.rel target = $region3
    $region8: #{tpu_custom_call.1} parent=1 // loop_exit
      _
    %387 = vsyncpa [#allocation3], 1
    %s388 = scalar_lea.sflag [#allocation3], 1
    %389 = vsyncpa %s388, 1
    %390 = vsyncpa [#allocation6], 1
    %391 = vsyncpa [#allocation4], 1
    %s392 = scalar_lea.sflag [#allocation4], 1
    %393 = vsyncpa %s392, 1

</llo_original>
